<compile_context>
chip_gen: v6e
topology: v6e:2x2x1
jax: 0.10.0
libtpu: 0.0.40
codegen_flags: <defaults>
</compile_context>

<pallas_src>
import jax
import jax.numpy as jnp
from jax.experimental import pallas as pl
from jax.experimental.pallas import tpu as pltpu


def _round_up(v: int, m: int) -> int:
    return ((v + m - 1) // m) * m


def _cdiv(a: int, b: int) -> int:
    return (a + b - 1) // b


# ----------------------------------------------------------------------------
# Abstract base class (faithful mirror of the PyTorch module)
# ----------------------------------------------------------------------------
class Dynamics:
    """Base class for any dynamics (JAX mirror of the PyTorch module)."""

    def __init__(self, *args, **kwargs):
        super().__init__()

    def forward(self, x, u):
        raise NotImplementedError

    def __call__(self, x, u, **kwargs):
        return self.forward(x, u, **kwargs)

    @property
    def x_equilibrium(self):
        raise NotImplementedError

    @property
    def u_equilibrium(self):
        raise NotImplementedError


# ----------------------------------------------------------------------------
# Pallas kernel:  out = x @ A.T + u @ B.T   (two MXU pushes, f32 accumulation)
# ----------------------------------------------------------------------------
def _linear_dynamics_kernel(x_ref, u_ref, at_ref, bt_ref, o_ref):
    # x_ref : (bt, nx)   streamed over the batch axis
    # u_ref : (bt, nu)   streamed over the batch axis
    # at_ref: (nx, nx)   A.T, VMEM-resident (constant index_map)
    # bt_ref: (nu, nx)   B.T, VMEM-resident (constant index_map)
    # o_ref : (bt, nx)   contiguous, full-feature-dim writeback
    acc = jnp.dot(x_ref[...], at_ref[...], preferred_element_type=jnp.float32)
    acc = acc + jnp.dot(u_ref[...], bt_ref[...],
                        preferred_element_type=jnp.float32)
    o_ref[...] = acc.astype(o_ref.dtype)


class LinearDynamics(Dynamics):
    """Concrete dynamics: x_next = A x + B u, forward pass in a Pallas kernel."""

    def __init__(self, nx: int, nu: int, key):
        super().__init__()
        ka, kb = jax.random.split(key)
        # Deterministic synthetic parameters (no checkpoint).
        self.A = (jax.random.normal(ka, (nx, nx), jnp.float32)
                  / jnp.sqrt(jnp.float32(nx)))
        self.B = (jax.random.normal(kb, (nx, nu), jnp.float32)
                  / jnp.sqrt(jnp.float32(nu)))
        self.nx = nx
        self.nu = nu
        # One-time host-side pre-transpose (no in-kernel .T / XLU work).
        self.A_T = jnp.asarray(self.A.T)   # (nx, nx)
        self.B_T = jnp.asarray(self.B.T)   # (nu, nx)

    def forward(self, x, u, *, block_batch: int = 4096, stream_dtype=None):
        batch, nx = x.shape
        _, nu = u.shape
        assert nx == self.nx and nu == self.nu

        out_dtype = x.dtype
        sdt = jnp.dtype(stream_dtype) if stream_dtype is not None else jnp.dtype(x.dtype)
        # Sublane multiple for the batch-tile second-to-last dim:
        # 8 for 32-bit, 16 for 16-bit packed dtypes.
        sub = 8 if sdt.itemsize >= 4 else 16

        # Batch tile: large (amortize per-grid-step overhead), but capped so
        # moderate batches still yield >=2 tiles for 2-TC sharding on v7x.
        bt = min(block_batch, _round_up(max(_cdiv(batch, 2), 1), sub))
        bt = max(bt, sub)
        grid = (_cdiv(batch, bt),)

        xs = x.astype(sdt)
        us = u.astype(sdt)
        a_t = self.A_T.astype(sdt)
        b_t = self.B_T.astype(sdt)

        itm_in = sdt.itemsize
        itm_out = jnp.dtype(out_dtype).itemsize
        cost = pl.CostEstimate(
            flops=2 * batch * (nx + nu) * nx,
            bytes_accessed=(batch * (nx + nu) * itm_in          # x, u reads
                            + batch * nx * itm_out              # output write
                            + (nx + nu) * nx * itm_in),         # weights
            transcendentals=0,
        )

        out = pl.pallas_call(
            _linear_dynamics_kernel,
            out_shape=jax.ShapeDtypeStruct((batch, nx), out_dtype),
            grid_spec=pl.GridSpec(
                grid=grid,
                in_specs=[
                    # x / u tiles march over the batch axis; last dim is the
                    # full array dim (no lane padding, no wrapper concat).
                    pl.BlockSpec((bt, nx), lambda i: (i, 0)),
                    pl.BlockSpec((bt, nu), lambda i: (i, 0)),
                    # Weights: constant index_map -> stay VMEM-resident,
                    # not re-DMA'd per batch tile.
                    pl.BlockSpec((nx, nx), lambda i: (0, 0)),
                    pl.BlockSpec((nu, nx), lambda i: (0, 0)),
                ],
                out_specs=pl.BlockSpec((bt, nx), lambda i: (i, 0)),
            ),
            compiler_params=pltpu.CompilerParams(
                # Batch tiles are independent -> shard across TCs (v7x).
                dimension_semantics=("parallel",)),
            cost_estimate=cost,
        )(xs, us, a_t, b_t)

        return out

    @property
    def x_equilibrium(self):
        return jnp.zeros((self.nx,), jnp.float32)

    @property
    def u_equilibrium(self):
        return jnp.zeros((self.nu,), jnp.float32)


if __name__ == "__main__":
    key = jax.random.PRNGKey(0)
    k_x, k_u, k_p, k_x2, k_u2 = jax.random.split(key, 5)

    batch, nx, nu = 8, 16, 4
    x = jax.random.normal(k_x, (batch, nx), jnp.float32)
    u = jax.random.normal(k_u, (batch, nu), jnp.float32)

    # Base class contract check: forward is abstract.
    base = Dynamics()
    try:
        base.forward(x, u)
        raise AssertionError("base Dynamics.forward should raise")
    except NotImplementedError:
        pass

    dyn = LinearDynamics(nx, nu, k_p)

    # Small-batch path (single tile).
    out = jax.block_until_ready(dyn(x, u))
    ref = x @ dyn.A.T + u @ dyn.B.T
    assert out.shape == (batch, nx)
    assert jnp.allclose(out, ref, atol=1e-4, rtol=1e-4)

    # Ragged-batch path (exercises cdiv grid + masked last block; >=2 tiles).
    batch2 = 37
    x2 = jax.random.normal(k_x2, (batch2, nx), jnp.float32)
    u2 = jax.random.normal(k_u2, (batch2, nu), jnp.float32)
    out2 = jax.block_until_ready(dyn(x2, u2))
    ref2 = x2 @ dyn.A.T + u2 @ dyn.B.T
    assert out2.shape == (batch2, nx)
    assert jnp.allclose(out2, ref2, atol=1e-4, rtol=1e-4)

    # bf16 streaming path (halved HBM traffic; f32 accumulation) — looser tol.
    out3 = jax.block_until_ready(dyn(x2, u2, stream_dtype=jnp.bfloat16))
    assert out3.shape == (batch2, nx)
    assert jnp.allclose(out3, ref2, atol=5e-2, rtol=5e-2)

    print("KERNEL_OK")
</pallas_src>

<mosaic_0001>
module attributes {stable_mosaic.version = 11 : i64} {
  func.func @_linear_dynamics_kernel(%arg0: i32, %arg1: memref<8x16xf32, #tpu.memory_space<vmem>>, %arg2: memref<8x4xf32, #tpu.memory_space<vmem>>, %arg3: memref<16x16xf32, #tpu.memory_space<vmem>>, %arg4: memref<4x16xf32, #tpu.memory_space<vmem>>, %arg5: memref<8x16xf32, #tpu.memory_space<vmem>>) attributes {dimension_semantics = [#tpu.dimension_semantics<parallel>], iteration_bounds = array<i64: 1>, scalar_prefetch = 0 : i64, scratch_operands = 0 : i64, tpu.core_type = #tpu.core_type<tc>, window_params = [{transform_indices = @transform_0, window_bounds = array<i64: 8, 16>}, {transform_indices = @transform_1, window_bounds = array<i64: 8, 4>}, {pipeline_mode = #tpu.pipeline_mode<synchronous>, transform_indices = @transform_2, window_bounds = array<i64: 16, 16>}, {pipeline_mode = #tpu.pipeline_mode<synchronous>, transform_indices = @transform_3, window_bounds = array<i64: 4, 16>}, {transform_indices = @transform_4, window_bounds = array<i64: 8, 16>}]} {
    %c0 = arith.constant 0 : index
    %c0_0 = arith.constant 0 : index
    %0 = vector.load %arg1[%c0, %c0_0] : memref<8x16xf32, #tpu.memory_space<vmem>>, vector<8x16xf32>
    %c0_1 = arith.constant 0 : index
    %c0_2 = arith.constant 0 : index
    %1 = vector.load %arg3[%c0_1, %c0_2] : memref<16x16xf32, #tpu.memory_space<vmem>>, vector<16x16xf32>
    %cst = arith.constant dense<0.000000e+00> : vector<8x16xf32>
    %2 = tpu.matmul %0, %1, %cst {dimension_numbers = #tpu.dot_dimension_numbers<[1], [0], [0], [1], [0, 0, 1, 1], [], []>} : vector<8x16xf32>, vector<16x16xf32>, vector<8x16xf32> -> vector<8x16xf32>
    %c0_3 = arith.constant 0 : index
    %c0_4 = arith.constant 0 : index
    %3 = vector.load %arg2[%c0_3, %c0_4] : memref<8x4xf32, #tpu.memory_space<vmem>>, vector<8x4xf32>
    %c0_5 = arith.constant 0 : index
    %c0_6 = arith.constant 0 : index
    %4 = vector.load %arg4[%c0_5, %c0_6] : memref<4x16xf32, #tpu.memory_space<vmem>>, vector<4x16xf32>
    %cst_7 = arith.constant dense<0.000000e+00> : vector<8x16xf32>
    %5 = tpu.matmul %3, %4, %cst_7 {dimension_numbers = #tpu.dot_dimension_numbers<[1], [0], [0], [1], [0, 0, 1, 1], [], []>} : vector<8x4xf32>, vector<4x16xf32>, vector<8x16xf32> -> vector<8x16xf32>
    %6 = arith.addf %2, %5 : vector<8x16xf32>
    %c0_8 = arith.constant 0 : index
    %c0_9 = arith.constant 0 : index
    %7 = vector.load %arg5[%c0_8, %c0_9] : memref<8x16xf32, #tpu.memory_space<vmem>>, vector<8x16xf32>
    tpu.vector_store %arg5[%c0_8, %c0_9], %6 {strides = array<i32>} : memref<8x16xf32, #tpu.memory_space<vmem>>, vector<8x16xf32>,
    return
  }
  func.func @transform_0(%arg0: i32) -> (i32, i32) {
    %c0_i32 = arith.constant 0 : i32
    %c0_i32_0 = arith.constant 0 : i32
    return %arg0, %c0_i32 : i32, i32
  }
  func.func @transform_1(%arg0: i32) -> (i32, i32) {
    %c0_i32 = arith.constant 0 : i32
    %c0_i32_0 = arith.constant 0 : i32
    return %arg0, %c0_i32 : i32, i32
  }
  func.func @transform_2(%arg0: i32) -> (i32, i32) {
    %c0_i32 = arith.constant 0 : i32
    %c0_i32_0 = arith.constant 0 : i32
    %c0_i32_1 = arith.constant 0 : i32
    return %c0_i32, %c0_i32_0 : i32, i32
  }
  func.func @transform_3(%arg0: i32) -> (i32, i32) {
    %c0_i32 = arith.constant 0 : i32
    %c0_i32_0 = arith.constant 0 : i32
    %c0_i32_1 = arith.constant 0 : i32
    return %c0_i32, %c0_i32_0 : i32, i32
  }
  func.func @transform_4(%arg0: i32) -> (i32, i32) {
    %c0_i32 = arith.constant 0 : i32
    %c0_i32_0 = arith.constant 0 : i32
    return %arg0, %c0_i32 : i32, i32
  }
}

</mosaic_0001>

<llo_original>
// kernel: tpu_custom_call.1
$region0: #{tpu_custom_call.1}
  #allocation0 [shape = 'u32[]', space=smem, size = 0x4, offset = 0x4, fixed_abs, tag = 'smem constant byte address 0x4 - core index']
  #allocation1 [shape = 'u32[144,128]{1,0:T(1,128)}', space=vmem, size = 0x12000, scoped, tag = 'internal scratch']
  %s0 = inlined_call_operand.vmem [shape: f32[8,16], index: 0, kind: input, shape index: {}]
  %s1 = inlined_call_operand.vmem [shape: f32[8,4], index: 1, kind: input, shape index: {}]
  %s2 = inlined_call_operand.hbm [shape: f32[16,16], index: 2, kind: input, shape index: {}]
  %s3 = inlined_call_operand.vmem [shape: f32[4,16], index: 3, kind: input, shape index: {}]
  %s4 = inlined_call_operand.hbm [shape: f32[8,16], index: 4, kind: output, shape index: {}]
  %s5 = sld [smem:[#allocation0]]
  $region30: #{tpu_custom_call.1} parent=0
    _
  %s7 = ssub.s32 1, %s5
  %s8 = scalar_select 0, %s7, %s5
  $region1: #{tpu_custom_call.1} parent=0
    #allocation2 [shape = 'u8[8192]{0}', space=vmem, size = 0x2000, scoped, tag = 'input window, operand 2, single buffered']
    #allocation3 [shape = 's32[1]{0}', space=sflag, size = 0x4, scoped, tag = 'scoped memory for tpu_custom_call.1']
    #allocation4 [shape = 's32[1]{0}', space=sflag, size = 0x4, scoped, tag = 'scoped memory for tpu_custom_call.1']
    #allocation5 [shape = 'u8[4096]{0}', space=vmem, size = 0x1000, scoped, tag = 'output window, operand 0, single buffered']
    %9 = vsyncpa [#allocation3], 0
    %10 = vsyncpa [#allocation4], 0
    // Predicated region
    $region2: #{tpu_custom_call.1} parent=1 // pred_check
      _
    $region3: #{tpu_custom_call.1} parent=1 // pred_check_branch
      %12 = sbr.rel (0) target = $region5
    $region4: #{tpu_custom_call.1} parent=1 // pred_region
      _
    $region5: #{tpu_custom_call.1} parent=1 // pred_fallthru
      _
    // Predicated region
    $region6: #{tpu_custom_call.1} parent=1 // pred_check
      _
    $region7: #{tpu_custom_call.1} parent=1 // pred_check_branch
      %14 = sbr.rel (0) target = $region9
    $region8: #{tpu_custom_call.1} parent=1 // pred_region
      _
    $region9: #{tpu_custom_call.1} parent=1 // pred_fallthru
      _
    // Predicated region
    $region10: #{tpu_custom_call.1} parent=1 // pred_check
      _
    $region11: #{tpu_custom_call.1} parent=1 // pred_check_branch
      %16 = sbr.rel (0) target = $region13
    $region12: #{tpu_custom_call.1} parent=1 // pred_region
      %s18 = ssub.s32 256, 256
      %19 = vsyncadd [#allocation3], %s18
      %s20 = sshll.u32 [#allocation2], 4
      %s21 = int_to_ptr.vmem [resolvable:$true] %s20
      %26 = dma.hbm_to_vmem [thread:$0]  %s2, 256, %s21, [#allocation3], 128, 128, 8
    $region13: #{tpu_custom_call.1} parent=1 // pred_fallthru
      _
    // Predicated region
    $region14: #{tpu_custom_call.1} parent=1 // pred_check
      _
    $region15: #{tpu_custom_call.1} parent=1 // pred_check_branch
      %28 = sbr.rel (0) target = $region17
    $region16: #{tpu_custom_call.1} parent=1 // pred_region
      _
    $region17: #{tpu_custom_call.1} parent=1 // pred_fallthru
      _
    // Predicated region
    $region18: #{tpu_custom_call.1} parent=1 // pred_check
      _
    $region19: #{tpu_custom_call.1} parent=1 // pred_check_branch
      %30 = sbr.rel (0) target = $region21
    $region20: #{tpu_custom_call.1} parent=1 // pred_region
      %31 = dma.done [#allocation3], 256
    $region21: #{tpu_custom_call.1} parent=1 // pred_fallthru
      _
    %v32 = vld [vmem:[%s0] sm:$0xff]
    %v33 = vld [vmem:[#allocation2] sm:$0xff]
    %v34 = vld [vmem:[#allocation2 + $0x8] sm:$0xff]
    %v35 = vld [vmem:[%s1] sm:$0xff]
    %v36 = vld [vmem:[%s3] sm:$0xf]
    %vm37 = vcmask 31744
    %v39 = vsel %vm37, %v35, 0
    %vm41 = vcmask 1043456
    %v43 = vsel %vm41, %v36, 0
    %45 = vmatprep.subr.mxu0 0.0
    %46 = vmatpush1.msra.mxu0 0.0
    %47 = vmatprep.subr.mxu0 0.0
    %48 = vmatpush1.msra.mxu0 0.0
    %49 = vmatprep.subr.mxu0 0.0
    %50 = vmatpush1.msra.mxu0 0.0
    %51 = vmatprep.subr.mxu0 0.0
    %52 = vmatpush1.msra.mxu0 0.0
    %53 = vmatprep.subr.mxu0 0.0
    %54 = vmatpush1.msra.mxu0 0.0
    %55 = vmatprep.subr.mxu0 0.0
    %56 = vmatpush1.msra.mxu0 0.0
    %57 = vmatprep.subr.mxu0 0.0
    %58 = vmatpush1.msra.mxu0 0.0
    %59 = vmatprep.subr.mxu0 0.0
    %60 = vmatpush1.msra.mxu0 0.0
    %61 = vmatprep.subr.mxu0 0.0
    %62 = vmatpush1.msra.mxu0 0.0
    %63 = vmatprep.subr.mxu0 0.0
    %64 = vmatpush1.msra.mxu0 0.0
    %65 = vmatprep.subr.mxu0 0.0
    %66 = vmatpush1.msra.mxu0 0.0
    %67 = vmatprep.subr.mxu0 0.0
    %68 = vmatpush1.msra.mxu0 0.0
    %69 = vmatprep.subr.mxu0 0.0
    %70 = vmatpush1.msra.mxu0 0.0
    %71 = vmatprep.subr.mxu0 0.0
    %72 = vmatpush1.msra.mxu0 0.0
    %73 = vmatprep.subr.mxu0 0.0
    %74 = vmatpush1.msra.mxu0 0.0
    %75 = vmatprep.subr.mxu0 0.0
    %76 = vmatpush1.msra.mxu0 %v43
    %77 = vmatprep.subr.mxu0 0.0
    %78 = vmatpush2.msra.mxu0 0.0
    %79 = vmatprep.subr.mxu0 0.0
    %80 = vmatpush2.msra.mxu0 0.0
    %81 = vmatprep.subr.mxu0 0.0
    %82 = vmatpush2.msra.mxu0 0.0
    %83 = vmatprep.subr.mxu0 0.0
    %84 = vmatpush2.msra.mxu0 0.0
    %85 = vmatprep.subr.mxu0 0.0
    %86 = vmatpush2.msra.mxu0 0.0
    %87 = vmatprep.subr.mxu0 0.0
    %88 = vmatpush2.msra.mxu0 0.0
    %89 = vmatprep.subr.mxu0 0.0
    %90 = vmatpush2.msra.mxu0 0.0
    %91 = vmatprep.subr.mxu0 0.0
    %92 = vmatpush2.msra.mxu0 0.0
    %93 = vmatprep.subr.mxu0 0.0
    %94 = vmatpush2.msra.mxu0 0.0
    %95 = vmatprep.subr.mxu0 0.0
    %96 = vmatpush2.msra.mxu0 0.0
    %97 = vmatprep.subr.mxu0 0.0
    %98 = vmatpush2.msra.mxu0 0.0
    %99 = vmatprep.subr.mxu0 0.0
    %100 = vmatpush2.msra.mxu0 0.0
    %101 = vmatprep.subr.mxu0 0.0
    %102 = vmatpush2.msra.mxu0 0.0
    %103 = vmatprep.subr.mxu0 0.0
    %104 = vmatpush2.msra.mxu0 0.0
    %105 = vmatprep.subr.mxu0 0.0
    %106 = vmatpush2.msra.mxu0 0.0
    %107 = vmatprep.subr.mxu0 0.0
    %108 = vmatpush2.msra.mxu0 0.0
    %109 = vmatprep.mubr.f32.mxu0 0.0
    %110 = vmatmul.mubr.f32.gmra.mxu0 %v39
    %v111 = vpop.f32.mrf.mxu0
    %v112 = vadd.f32 0.0, %v111
    %v113 = vpop.f32.mrf.mxu0
    %114 = vdwg.mxu0
    %vm115 = vcmask 130048
    %v117 = vsel %vm115, %v32, 0
    %119 = vmatprep.subr.mxu0 0.0
    %120 = vmatpush1.msra.mxu0 0.0
    %121 = vmatprep.subr.mxu0 0.0
    %122 = vmatpush1.msra.mxu0 0.0
    %123 = vmatprep.subr.mxu0 0.0
    %124 = vmatpush1.msra.mxu0 0.0
    %125 = vmatprep.subr.mxu0 0.0
    %126 = vmatpush1.msra.mxu0 0.0
    %127 = vmatprep.subr.mxu0 0.0
    %128 = vmatpush1.msra.mxu0 0.0
    %129 = vmatprep.subr.mxu0 0.0
    %130 = vmatpush1.msra.mxu0 0.0
    %131 = vmatprep.subr.mxu0 0.0
    %132 = vmatpush1.msra.mxu0 0.0
    %133 = vmatprep.subr.mxu0 0.0
    %134 = vmatpush1.msra.mxu0 0.0
    %135 = vmatprep.subr.mxu0 0.0
    %136 = vmatpush1.msra.mxu0 0.0
    %137 = vmatprep.subr.mxu0 0.0
    %138 = vmatpush1.msra.mxu0 0.0
    %139 = vmatprep.subr.mxu0 0.0
    %140 = vmatpush1.msra.mxu0 0.0
    %141 = vmatprep.subr.mxu0 0.0
    %142 = vmatpush1.msra.mxu0 0.0
    %143 = vmatprep.subr.mxu0 0.0
    %144 = vmatpush1.msra.mxu0 0.0
    %145 = vmatprep.subr.mxu0 0.0
    %146 = vmatpush1.msra.mxu0 0.0
    %147 = vmatprep.subr.mxu0 0.0
    %148 = vmatpush1.msra.mxu0 %v34
    %149 = vmatprep.subr.mxu0 0.0
    %150 = vmatpush1.msra.mxu0 %v33
    %151 = vmatprep.subr.mxu0 0.0
    %152 = vmatpush2.msra.mxu0 0.0
    %153 = vmatprep.subr.mxu0 0.0
    %154 = vmatpush2.msra.mxu0 0.0
    %155 = vmatprep.subr.mxu0 0.0
    %156 = vmatpush2.msra.mxu0 0.0
    %157 = vmatprep.subr.mxu0 0.0
    %158 = vmatpush2.msra.mxu0 0.0
    %159 = vmatprep.subr.mxu0 0.0
    %160 = vmatpush2.msra.mxu0 0.0
    %161 = vmatprep.subr.mxu0 0.0
    %162 = vmatpush2.msra.mxu0 0.0
    %163 = vmatprep.subr.mxu0 0.0
    %164 = vmatpush2.msra.mxu0 0.0
    %165 = vmatprep.subr.mxu0 0.0
    %166 = vmatpush2.msra.mxu0 0.0
    %167 = vmatprep.subr.mxu0 0.0
    %168 = vmatpush2.msra.mxu0 0.0
    %169 = vmatprep.subr.mxu0 0.0
    %170 = vmatpush2.msra.mxu0 0.0
    %171 = vmatprep.subr.mxu0 0.0
    %172 = vmatpush2.msra.mxu0 0.0
    %173 = vmatprep.subr.mxu0 0.0
    %174 = vmatpush2.msra.mxu0 0.0
    %175 = vmatprep.subr.mxu0 0.0
    %176 = vmatpush2.msra.mxu0 0.0
    %177 = vmatprep.subr.mxu0 0.0
    %178 = vmatpush2.msra.mxu0 0.0
    %179 = vmatprep.subr.mxu0 0.0
    %180 = vmatpush2.msra.mxu0 0.0
    %181 = vmatprep.subr.mxu0 0.0
    %182 = vmatpush2.msra.mxu0 0.0
    %183 = vmatprep.mubr.f32.mxu0 0.0
    %184 = vmatmul.mubr.f32.gmra.mxu0 %v117
    %v185 = vpop.f32.mrf.mxu0
    %v186 = vadd.f32 %v112, %v185
    %v187 = vpop.f32.mrf.mxu0
    %188 = vdwg.mxu0
    %189 = vst.msk [vmem:[#allocation5] sm:$0xff] %vm115, %v186
    // Predicated region
    $region22: #{tpu_custom_call.1} parent=1 // pred_check
      _
    $region23: #{tpu_custom_call.1} parent=1 // pred_check_branch
      %191 = sbr.rel (0) target = $region25
    $region24: #{tpu_custom_call.1} parent=1 // pred_region
      %s193 = ssub.s32 128, 128
      %194 = vsyncadd [#allocation4], %s193
      %s196 = sshll.u32 [#allocation5], 4
      %s197 = int_to_ptr.vmem [resolvable:$true] %s196
      %199 = dma.vmem_to_hbm [thread:$0]  %s197, 128, %s4, [#allocation4]
    $region25: #{tpu_custom_call.1} parent=1 // pred_fallthru
      _
    // Predicated region
    $region26: #{tpu_custom_call.1} parent=1 // pred_check
      _
    $region27: #{tpu_custom_call.1} parent=1 // pred_check_branch
      %201 = sbr.rel (0) target = $region29
    $region28: #{tpu_custom_call.1} parent=1 // pred_region
      %202 = dma.done [#allocation4], 128
    $region29: #{tpu_custom_call.1} parent=1 // pred_fallthru
      _
    %203 = vsyncpa [#allocation3], 1
    %204 = vsyncpa [#allocation4], 1

</llo_original>
